<compile_context>
chip_gen: v5e
topology: v5e:2x2
jax: 0.10.0
libtpu: 0.0.40
codegen_flags: <defaults>
</compile_context>

<pallas_src>
import functools

import jax
import jax.numpy as jnp
from jax.experimental import pallas as pl
from jax.experimental.pallas import tpu as pltpu


def _round_up(x: int, m: int) -> int:
    return (x + m - 1) // m * m


# ---------------------------------------------------------------------------
# Generation-aware VMEM budgeting
# ---------------------------------------------------------------------------
_VMEM_BYTES_CACHE = None


def _physical_vmem_bytes() -> int:
    """Physical VMEM per TensorCore (128 MiB v5e/v6e, 64 MiB v7x), cached."""
    global _VMEM_BYTES_CACHE
    if _VMEM_BYTES_CACHE is None:
        cap = None
        try:
            info = pltpu.get_tpu_info()
            for attr in ("vmem_capacity_bytes", "vmem_size_bytes", "vmem_bytes"):
                v = getattr(info, attr, None)
                if v:
                    cap = int(v)
                    break
        except Exception:
            cap = None
        # Conservative fallback = v7x per-core VMEM (safe on every generation).
        _VMEM_BYTES_CACHE = cap if cap else 64 * 1024 * 1024
    return _VMEM_BYTES_CACHE


def _vmem_budget_bytes() -> int:
    """~75% of physical VMEM: ~96 MiB on v5e/v6e, ~48 MiB on v7x."""
    return int(_physical_vmem_bytes() * 3 // 4)


def _pick_tile(dim_padded: int, cap: int) -> int:
    """Largest tile <= cap dividing dim_padded (dim_padded is a 128-multiple)."""
    if dim_padded <= cap:
        return dim_padded
    for t in (1024, 512, 256, 128):
        if t <= cap and dim_padded % t == 0:
            return t
    return 128


# ---------------------------------------------------------------------------
# General tiled Linear(+ReLU):  y = act(x @ W + b)
# ---------------------------------------------------------------------------
def _linear_acc_kernel(x_ref, w_ref, b_ref, o_ref, acc_ref, *, apply_relu: bool):
    # Multi-K-step path: f32 accumulator scratch across the (arbitrary) K axis.
    k = pl.program_id(2)

    @pl.when(k == 0)
    def _():
        acc_ref[...] = jnp.zeros_like(acc_ref)

    acc_ref[...] += jnp.dot(
        x_ref[...], w_ref[...], preferred_element_type=jnp.float32
    )

    @pl.when(k == pl.num_programs(2) - 1)
    def _():
        y = acc_ref[...] + b_ref[...].astype(jnp.float32)
        if apply_relu:
            y = jnp.maximum(y, 0.0)
        o_ref[...] = y.astype(o_ref.dtype)


def _linear_single_k_kernel(x_ref, w_ref, b_ref, o_ref, *, apply_relu: bool):
    # Whole K in one tile: no accumulator scratch, direct epilogue store.
    y = jnp.dot(x_ref[...], w_ref[...], preferred_element_type=jnp.float32)
    y = y + b_ref[...].astype(jnp.float32)
    if apply_relu:
        y = jnp.maximum(y, 0.0)
    o_ref[...] = y.astype(o_ref.dtype)


def _linear_padded(xp, wp, bp, *, apply_relu, tm, tn, tk, vmem_limit):
    """Pre-padded linear: xp:(Mp,Kp) wp:(Kp,Np) bp:(1,Np) -> (Mp,Np) padded."""
    Mp, Kp = xp.shape
    Kp2, Np = wp.shape
    assert Kp == Kp2 and Mp % tm == 0 and Kp % tk == 0 and Np % tn == 0
    nk = Kp // tk

    if nk == 1:
        return pl.pallas_call(
            functools.partial(_linear_single_k_kernel, apply_relu=apply_relu),
            out_shape=jax.ShapeDtypeStruct((Mp, Np), xp.dtype),
            grid=(Mp // tm, Np // tn),
            in_specs=[
                pl.BlockSpec((tm, Kp), lambda i, j: (i, 0)),
                pl.BlockSpec((Kp, tn), lambda i, j: (0, j)),
                pl.BlockSpec((1, tn), lambda i, j: (0, j)),
            ],
            out_specs=pl.BlockSpec((tm, tn), lambda i, j: (i, j)),
            compiler_params=pltpu.CompilerParams(
                dimension_semantics=("parallel", "parallel"),
                vmem_limit_bytes=vmem_limit,
            ),
        )(xp, wp, bp)

    return pl.pallas_call(
        functools.partial(_linear_acc_kernel, apply_relu=apply_relu),
        out_shape=jax.ShapeDtypeStruct((Mp, Np), xp.dtype),
        grid=(Mp // tm, Np // tn, nk),
        in_specs=[
            pl.BlockSpec((tm, tk), lambda i, j, k: (i, k)),
            pl.BlockSpec((tk, tn), lambda i, j, k: (k, j)),
            pl.BlockSpec((1, tn), lambda i, j, k: (0, j)),
        ],
        out_specs=pl.BlockSpec((tm, tn), lambda i, j, k: (i, j)),
        scratch_shapes=[pltpu.VMEM((tm, tn), jnp.float32)],
        compiler_params=pltpu.CompilerParams(
            dimension_semantics=("parallel", "parallel", "arbitrary"),
            vmem_limit_bytes=vmem_limit,
        ),
    )(xp, wp, bp)


def linear_pallas(x, w, b, *, apply_relu=False, tm=512, tn=512, tk=1024,
                  vmem_limit=None):
    """y = act(x @ w + b).  x:(B,K)  w:(K,N)  b:(N,).  General entry point."""
    B, K = x.shape
    K2, N = w.shape
    assert K == K2 and b.shape == (N,)
    Kp = _round_up(K, 128)
    Np = _round_up(N, 128)
    tk = _pick_tile(Kp, tk)
    tn = _pick_tile(Np, tn)
    tm = min(tm, _round_up(B, 8))
    Mp = _round_up(B, tm)
    if vmem_limit is None:
        vmem_limit = _vmem_budget_bytes()

    xp = jnp.pad(x, ((0, Mp - B), (0, Kp - K)))
    wp = jnp.pad(w, ((0, Kp - K), (0, Np - N)))
    bp = jnp.pad(b, (0, Np - N)).reshape(1, Np)
    out = _linear_padded(xp, wp, bp, apply_relu=apply_relu,
                         tm=tm, tn=tn, tk=tk, vmem_limit=vmem_limit)
    return out[:B, :N]


# ---------------------------------------------------------------------------
# Fused MLP: all layers in one pallas_call, activation kept in VMEM scratch.
# ---------------------------------------------------------------------------
def _fused_mlp_kernel(x_ref, w_ref, b_ref, o_ref, h_ref, *, n_layers, np_out):
    # x_ref:(tb,Dp)  w_ref:(Dp,Dp)  b_ref:(1,Dp)  o_ref:(tb,Np_out)
    # h_ref:(tb,Dp) f32 scratch — running activation across the layer axis.
    layer = pl.program_id(1)
    last = n_layers - 1

    def step(h):
        lhs = h.astype(w_ref.dtype)
        y = jnp.dot(lhs, w_ref[...], preferred_element_type=jnp.float32)
        y = y + b_ref[...].astype(jnp.float32)

        @pl.when(layer < last)          # hidden layer: ReLU, keep in scratch
        def _():
            h_ref[...] = jnp.maximum(y, 0.0)

        @pl.when(layer == last)         # output layer: no activation, store
        def _():
            o_ref[...] = y[:, :np_out].astype(o_ref.dtype)

    @pl.when(layer == 0)                # layer 0 reads x directly (no copy)
    def _():
        step(x_ref[...])

    @pl.when(layer != 0)
    def _():
        step(h_ref[...])


def _fused_vmem_bytes(tb, Dp, Np_out, x_item, w_item, out_item):
    return (2 * tb * Dp * x_item          # x blocks (double-buffered)
            + 2 * Dp * Dp * w_item        # weight blocks (double-buffered)
            + 2 * Dp * w_item             # bias blocks
            + 2 * tb * Np_out * out_item  # output blocks
            + tb * Dp * 4)                # f32 running-activation scratch


def _pick_tb(batch, Dp, Np_out, budget, x_item, w_item, out_item):
    b8 = _round_up(batch, 8)
    cand = []
    if b8 <= 512:
        cand.append(b8)
    cand += [t for t in (512, 256, 128, 64, 32, 16, 8) if t <= max(b8, 8)]
    for tb in cand:
        if _fused_vmem_bytes(tb, Dp, Np_out, x_item, w_item, out_item) <= budget:
            return tb
    return None


# ---------------------------------------------------------------------------
# MLP wrapper: prepares (pads/stacks) parameters once, then calls kernels.
# ---------------------------------------------------------------------------
class PallasMLP:
    """Forward pass of MLP_pt (hidden Linear+ReLU layers, final Linear)."""

    FUSED_INFLATION_LIMIT = 1.3   # L*Dp^2 / sum_l(Kp_l*Np_l) above this -> tiled

    def __init__(self, params, weight_dtype=None):
        # params: list of (w:(K,N), b:(N,)), already in (in, out) layout.
        if weight_dtype is not None:
            params = [(w.astype(weight_dtype), b.astype(weight_dtype))
                      for w, b in params]
        self.compute_dtype = weight_dtype
        self.L = len(params)
        self.dims = [params[0][0].shape[0]] + [w.shape[1] for w, _ in params]
        self.dpad = [_round_up(d, 128) for d in self.dims]

        # Per-layer padded params for the tiled fallback path (built once).
        self.tiled_params = []
        for l, (w, b) in enumerate(params):
            Kp, Np = self.dpad[l], self.dpad[l + 1]
            wp = jnp.pad(w, ((0, Kp - w.shape[0]), (0, Np - w.shape[1])))
            bp = jnp.pad(b, (0, Np - b.shape[0])).reshape(1, Np)
            tk = _pick_tile(Kp, 1024)
            tn = _pick_tile(Np, 512)
            self.tiled_params.append((wp, bp, tk, tn))

        # Fused-path stacks (built once, only if padding inflation is modest).
        self.Dp = max(self.dpad)
        self.Np_out = self.dpad[-1]
        real_bytes = sum(self.dpad[l] * self.dpad[l + 1] for l in range(self.L))
        inflation = (self.L * self.Dp * self.Dp) / float(real_bytes)
        self.fused_ok = inflation <= self.FUSED_INFLATION_LIMIT
        if self.fused_ok:
            Dp = self.Dp
            self.ws = jnp.stack(
                [jnp.pad(w, ((0, Dp - w.shape[0]), (0, Dp - w.shape[1])))
                 for w, _ in params])
            self.bs = jnp.stack(
                [jnp.pad(b, (0, Dp - b.shape[0])).reshape(1, Dp)
                 for _, b in params])
        else:
            self.ws = self.bs = None

    # -- fused: one pallas_call, (batch-tile, layer) grid --------------------
    def _fused_forward(self, x, tb, vmem_limit):
        B, D_in = x.shape
        Bp = _round_up(B, tb)
        Dp, Np_out, L = self.Dp, self.Np_out, self.L
        xp = jnp.pad(x, ((0, Bp - B), (0, Dp - D_in)))
        out = pl.pallas_call(
            functools.partial(_fused_mlp_kernel, n_layers=L, np_out=Np_out),
            out_shape=jax.ShapeDtypeStruct((Bp, Np_out), x.dtype),
            grid=(Bp // tb, L),
            in_specs=[
                pl.BlockSpec((tb, Dp), lambda i, l: (i, 0)),                  # x
                pl.BlockSpec((pl.Squeezed(), Dp, Dp), lambda i, l: (l, 0, 0)),  # W_l
                pl.BlockSpec((pl.Squeezed(), 1, Dp), lambda i, l: (l, 0, 0)),   # b_l
            ],
            out_specs=pl.BlockSpec((tb, Np_out), lambda i, l: (i, 0)),
            scratch_shapes=[pltpu.VMEM((tb, Dp), jnp.float32)],
            compiler_params=pltpu.CompilerParams(
                dimension_semantics=("parallel", "arbitrary"),
                vmem_limit_bytes=vmem_limit,
            ),
        )(xp, self.ws, self.bs)
        return out[:B, : self.dims[-1]]

    # -- tiled fallback: activations stay padded across layers ---------------
    def _tiled_forward(self, x):
        B = x.shape[0]
        tm = min(512, _round_up(B, 8))
        Mp = _round_up(B, tm)
        vmem_limit = _vmem_budget_bytes()
        h = jnp.pad(x, ((0, Mp - B), (0, self.dpad[0] - self.dims[0])))
        for l, (wp, bp, tk, tn) in enumerate(self.tiled_params):
            h = _linear_padded(h, wp, bp,
                               apply_relu=(l < self.L - 1),
                               tm=tm, tn=tn, tk=tk, vmem_limit=vmem_limit)
        return h[:B, : self.dims[-1]]

    def __call__(self, x, force_tiled=False):
        orig_dtype = x.dtype
        xc = x.astype(self.compute_dtype) if self.compute_dtype is not None else x
        out = None
        if self.fused_ok and not force_tiled:
            budget = _vmem_budget_bytes()
            tb = _pick_tb(xc.shape[0], self.Dp, self.Np_out, budget,
                          xc.dtype.itemsize, self.ws.dtype.itemsize,
                          xc.dtype.itemsize)
            if tb is not None:
                out = self._fused_forward(xc, tb, budget)
        if out is None:
            out = self._tiled_forward(xc)
        return out.astype(orig_dtype)


# ---------------------------------------------------------------------------
# Parameter init (matches nn.Linear's U(-1/sqrt(in), 1/sqrt(in)))
# ---------------------------------------------------------------------------
def init_mlp_params(key, input_dim, hidden_dims, output_dim, dtype=jnp.float32):
    dims = [input_dim] + list(hidden_dims) + [output_dim]
    params = []
    for i in range(len(dims) - 1):
        key, kw, kb = jax.random.split(key, 3)
        bound = 1.0 / float(jnp.sqrt(dims[i]))
        w = jax.random.uniform(kw, (dims[i], dims[i + 1]), dtype,
                               minval=-bound, maxval=bound)
        b = jax.random.uniform(kb, (dims[i + 1],), dtype,
                               minval=-bound, maxval=bound)
        params.append((w, b))
    return params


# ---------------------------------------------------------------------------
if __name__ == "__main__":
    key = jax.random.PRNGKey(0)

    batch = 8
    input_dim = 32
    hidden_dims = [64, 64]
    output_dim = 16

    key, kx = jax.random.split(key)
    x = jax.random.normal(kx, (batch, input_dim), jnp.float32)
    params = init_mlp_params(key, input_dim, hidden_dims, output_dim)

    # Pure-JAX reference.
    ref = x
    for i, (w, b) in enumerate(params):
        ref = jnp.dot(ref, w, precision=jax.lax.Precision.HIGHEST) + b
        if i < len(params) - 1:
            ref = jnp.maximum(ref, 0.0)

    # Build once: weights padded/stacked at construction, not per call.
    mlp = PallasMLP(params)

    # Path 1: fused single-kernel MLP (batch-tile x layer grid).
    out_fused = jax.block_until_ready(mlp(x))
    assert out_fused.shape == (batch, output_dim)
    assert jnp.allclose(out_fused, ref, atol=1e-4, rtol=1e-4)

    # Path 2: per-layer tiled kernels with padded activation chaining.
    out_tiled = jax.block_until_ready(mlp(x, force_tiled=True))
    assert out_tiled.shape == (batch, output_dim)
    assert jnp.allclose(out_tiled, ref, atol=1e-4, rtol=1e-4)

    # bf16 weight/activation streaming (halved HBM bytes), f32 accumulation.
    mlp_bf16 = PallasMLP(params, weight_dtype=jnp.bfloat16)
    out_bf16 = jax.block_until_ready(mlp_bf16(x))
    assert out_bf16.shape == (batch, output_dim)
    assert jnp.allclose(out_bf16, ref, atol=5e-2, rtol=5e-2)

    # Exercise the multi-K-step accumulation path of the tiled linear kernel.
    key, kx2, kw2, kb2 = jax.random.split(key, 4)
    x2 = jax.random.normal(kx2, (128, 320), jnp.float32)
    w2 = jax.random.normal(kw2, (320, 256), jnp.float32) * 0.05
    b2 = jax.random.normal(kb2, (256,), jnp.float32)
    y2 = jax.block_until_ready(
        linear_pallas(x2, w2, b2, apply_relu=True, tm=128, tn=128, tk=128)
    )
    ref2 = jnp.maximum(
        jnp.dot(x2, w2, precision=jax.lax.Precision.HIGHEST) + b2, 0.0
    )
    assert jnp.allclose(y2, ref2, atol=2e-2, rtol=2e-2)

    print("KERNEL_OK")
</pallas_src>

<mosaic_0001>
module attributes {stable_mosaic.version = 11 : i64} {
  func.func @_fused_mlp_kernel(%arg0: i32, %arg1: i32, %arg2: memref<8x128xf32, #tpu.memory_space<vmem>>, %arg3: memref<1x128x128xf32, #tpu.memory_space<vmem>>, %arg4: memref<1x1x128xf32, #tpu.memory_space<vmem>>, %arg5: memref<8x128xf32, #tpu.memory_space<vmem>>, %arg6: memref<8x128xf32, #tpu.memory_space<vmem>>) attributes {dimension_semantics = [#tpu.dimension_semantics<parallel>, #tpu.dimension_semantics<arbitrary>], iteration_bounds = array<i64: 1, 3>, scalar_prefetch = 0 : i64, scratch_operands = 1 : i64, tpu.core_type = #tpu.core_type<tc>, window_params = [{transform_indices = @transform_0, window_bounds = array<i64: 8, 128>}, {transform_indices = @transform_1, window_bounds = array<i64: 1, 128, 128>}, {transform_indices = @transform_2, window_bounds = array<i64: 1, 1, 128>}, {transform_indices = @transform_3, window_bounds = array<i64: 8, 128>}]} {
    %c0_i32 = arith.constant 0 : i32
    %0 = arith.cmpi eq, %arg1, %c0_i32 : i32
    %1 = arith.extui %0 : i1 to i32
    %c0_i32_0 = arith.constant 0 : i32
    %2 = arith.cmpi ne, %1, %c0_i32_0 : i32
    scf.if %2 {
      %c0 = arith.constant 0 : index
      %c0_3 = arith.constant 0 : index
      %6 = vector.load %arg2[%c0, %c0_3] : memref<8x128xf32, #tpu.memory_space<vmem>>, vector<8x128xf32>
      %c0_4 = arith.constant 0 : index
      %c0_5 = arith.constant 0 : index
      %c0_6 = arith.constant 0 : index
      %7 = vector.load %arg3[%c0_4, %c0_5, %c0_6] : memref<1x128x128xf32, #tpu.memory_space<vmem>>, vector<1x128x128xf32>
      %8 = vector.shape_cast %7 : vector<1x128x128xf32> to vector<128x128xf32>
      %cst = arith.constant dense<0.000000e+00> : vector<8x128xf32>
      %9 = tpu.matmul %6, %8, %cst {dimension_numbers = #tpu.dot_dimension_numbers<[1], [0], [0], [1], [0, 0, 1, 1], [], []>} : vector<8x128xf32>, vector<128x128xf32>, vector<8x128xf32> -> vector<8x128xf32>
      %c0_7 = arith.constant 0 : index
      %c0_8 = arith.constant 0 : index
      %c0_9 = arith.constant 0 : index
      %10 = vector.load %arg4[%c0_7, %c0_8, %c0_9] : memref<1x1x128xf32, #tpu.memory_space<vmem>>, vector<1x1x128xf32>
      %11 = vector.shape_cast %10 : vector<1x1x128xf32> to vector<1x128xf32>
      %12 = vector.broadcast %11 : vector<1x128xf32> to vector<8x128xf32>
      %13 = arith.addf %9, %12 : vector<8x128xf32>
      %c2_i32 = arith.constant 2 : i32
      %14 = arith.cmpi slt, %arg1, %c2_i32 : i32
      %15 = arith.extui %14 : i1 to i32
      %c0_i32_10 = arith.constant 0 : i32
      %16 = arith.cmpi ne, %15, %c0_i32_10 : i32
      scf.if %16 {
        %cst_13 = arith.constant 0.000000e+00 : f32
        %20 = vector.broadcast %cst_13 : f32 to vector<8x128xf32>
        %21 = arith.maximumf %13, %20 : vector<8x128xf32>
        %c0_14 = arith.constant 0 : index
        %c0_15 = arith.constant 0 : index
        %22 = vector.load %arg6[%c0_14, %c0_15] : memref<8x128xf32, #tpu.memory_space<vmem>>, vector<8x128xf32>
        tpu.vector_store %arg6[%c0_14, %c0_15], %21 {strides = array<i32>} : memref<8x128xf32, #tpu.memory_space<vmem>>, vector<8x128xf32>,
      } else {
      }
      %c2_i32_11 = arith.constant 2 : i32
      %17 = arith.cmpi eq, %arg1, %c2_i32_11 : i32
      %18 = arith.extui %17 : i1 to i32
      %c0_i32_12 = arith.constant 0 : i32
      %19 = arith.cmpi ne, %18, %c0_i32_12 : i32
      scf.if %19 {
        %c0_13 = arith.constant 0 : index
        %c0_14 = arith.constant 0 : index
        %20 = vector.load %arg5[%c0_13, %c0_14] : memref<8x128xf32, #tpu.memory_space<vmem>>, vector<8x128xf32>
        tpu.vector_store %arg5[%c0_13, %c0_14], %13 {strides = array<i32>} : memref<8x128xf32, #tpu.memory_space<vmem>>, vector<8x128xf32>,
      } else {
      }
    } else {
    }
    %c0_i32_1 = arith.constant 0 : i32
    %3 = arith.cmpi ne, %arg1, %c0_i32_1 : i32
    %4 = arith.extui %3 : i1 to i32
    %c0_i32_2 = arith.constant 0 : i32
    %5 = arith.cmpi ne, %4, %c0_i32_2 : i32
    scf.if %5 {
      %c0 = arith.constant 0 : index
      %c0_3 = arith.constant 0 : index
      %6 = vector.load %arg6[%c0, %c0_3] : memref<8x128xf32, #tpu.memory_space<vmem>>, vector<8x128xf32>
      %c0_4 = arith.constant 0 : index
      %c0_5 = arith.constant 0 : index
      %c0_6 = arith.constant 0 : index
      %7 = vector.load %arg3[%c0_4, %c0_5, %c0_6] : memref<1x128x128xf32, #tpu.memory_space<vmem>>, vector<1x128x128xf32>
      %8 = vector.shape_cast %7 : vector<1x128x128xf32> to vector<128x128xf32>
      %cst = arith.constant dense<0.000000e+00> : vector<8x128xf32>
      %9 = tpu.matmul %6, %8, %cst {dimension_numbers = #tpu.dot_dimension_numbers<[1], [0], [0], [1], [0, 0, 1, 1], [], []>} : vector<8x128xf32>, vector<128x128xf32>, vector<8x128xf32> -> vector<8x128xf32>
      %c0_7 = arith.constant 0 : index
      %c0_8 = arith.constant 0 : index
      %c0_9 = arith.constant 0 : index
      %10 = vector.load %arg4[%c0_7, %c0_8, %c0_9] : memref<1x1x128xf32, #tpu.memory_space<vmem>>, vector<1x1x128xf32>
      %11 = vector.shape_cast %10 : vector<1x1x128xf32> to vector<1x128xf32>
      %12 = vector.broadcast %11 : vector<1x128xf32> to vector<8x128xf32>
      %13 = arith.addf %9, %12 : vector<8x128xf32>
      %c2_i32 = arith.constant 2 : i32
      %14 = arith.cmpi slt, %arg1, %c2_i32 : i32
      %15 = arith.extui %14 : i1 to i32
      %c0_i32_10 = arith.constant 0 : i32
      %16 = arith.cmpi ne, %15, %c0_i32_10 : i32
      scf.if %16 {
        %cst_13 = arith.constant 0.000000e+00 : f32
        %20 = vector.broadcast %cst_13 : f32 to vector<8x128xf32>
        %21 = arith.maximumf %13, %20 : vector<8x128xf32>
        %c0_14 = arith.constant 0 : index
        %c0_15 = arith.constant 0 : index
        %22 = vector.load %arg6[%c0_14, %c0_15] : memref<8x128xf32, #tpu.memory_space<vmem>>, vector<8x128xf32>
        tpu.vector_store %arg6[%c0_14, %c0_15], %21 {strides = array<i32>} : memref<8x128xf32, #tpu.memory_space<vmem>>, vector<8x128xf32>,
      } else {
      }
      %c2_i32_11 = arith.constant 2 : i32
      %17 = arith.cmpi eq, %arg1, %c2_i32_11 : i32
      %18 = arith.extui %17 : i1 to i32
      %c0_i32_12 = arith.constant 0 : i32
      %19 = arith.cmpi ne, %18, %c0_i32_12 : i32
      scf.if %19 {
        %c0_13 = arith.constant 0 : index
        %c0_14 = arith.constant 0 : index
        %20 = vector.load %arg5[%c0_13, %c0_14] : memref<8x128xf32, #tpu.memory_space<vmem>>, vector<8x128xf32>
        tpu.vector_store %arg5[%c0_13, %c0_14], %13 {strides = array<i32>} : memref<8x128xf32, #tpu.memory_space<vmem>>, vector<8x128xf32>,
      } else {
      }
    } else {
    }
    return
  }
  func.func @transform_0(%arg0: i32, %arg1: i32) -> (i32, i32) {
    %c0_i32 = arith.constant 0 : i32
    %c0_i32_0 = arith.constant 0 : i32
    return %arg0, %c0_i32 : i32, i32
  }
  func.func @transform_1(%arg0: i32, %arg1: i32) -> (i32, i32, i32) {
    %c0_i32 = arith.constant 0 : i32
    %c0_i32_0 = arith.constant 0 : i32
    %c0_i32_1 = arith.constant 0 : i32
    return %arg1, %c0_i32, %c0_i32_0 : i32, i32, i32
  }
  func.func @transform_2(%arg0: i32, %arg1: i32) -> (i32, i32, i32) {
    %c0_i32 = arith.constant 0 : i32
    %c0_i32_0 = arith.constant 0 : i32
    %c0_i32_1 = arith.constant 0 : i32
    return %arg1, %c0_i32, %c0_i32_0 : i32, i32, i32
  }
  func.func @transform_3(%arg0: i32, %arg1: i32) -> (i32, i32) {
    %c0_i32 = arith.constant 0 : i32
    %c0_i32_0 = arith.constant 0 : i32
    return %arg0, %c0_i32 : i32, i32
  }
}

</mosaic_0001>

<llo_original>
// kernel: tpu_custom_call.1
$region0: #{tpu_custom_call.1}
  #allocation0 [shape = 'u32[]', space=smem, size = 0x4, offset = 0x4, fixed_abs, tag = 'smem constant byte address 0x4 - core index']
  #allocation1 [shape = 'u32[72,128]{1,0:T(1,128)}', space=vmem, size = 0x9000, scoped, tag = 'internal scratch']
  #allocation2 [shape = 'f32[8,128]{1,0:T(8,128)}', space=vmem, size = 0x1000, scoped, tag = 'scratch operand']
  %s0 = inlined_call_operand.hbm [shape: f32[8,128], index: 0, kind: input, shape index: {}]
  %s1 = inlined_call_operand.hbm [shape: f32[3,128,128], index: 1, kind: input, shape index: {}]
  %s2 = inlined_call_operand.hbm [shape: f32[3,1,128], index: 2, kind: input, shape index: {}]
  %s3 = inlined_call_operand.hbm [shape: f32[8,128], index: 3, kind: output, shape index: {}]
  %s4 = sld [smem:[#allocation0]]
  $region81: #{tpu_custom_call.1} parent=0
    _
  %s6 = ssub.s32 1, %s4
  %s7 = scalar_select 0, %s6, %s4
  $region1: #{tpu_custom_call.1} parent=0
    #allocation3 [shape = 'u8[4096]{0}', space=vmem, size = 0x1000, scoped, tag = 'input window, operand 0, single buffered']
    #allocation4 [shape = 's32[2]{0}', space=sflag, size = 0x8, scoped, tag = 'scoped memory for tpu_custom_call.1']
    #allocation5 [shape = 's32[2]{0}', space=sflag, size = 0x8, scoped, tag = 'scoped memory for tpu_custom_call.1']
    #allocation6 [shape = 'u8[131072]{0}', space=vmem, size = 0x20000, scoped, tag = 'input window, operand 1']
    #allocation7 [shape = 's32[2]{0}', space=sflag, size = 0x8, scoped, tag = 'scoped memory for tpu_custom_call.1']
    #allocation8 [shape = 'u8[1024]{0}', space=vmem, size = 0x400, scoped, tag = 'input window, operand 2']
    #allocation9 [shape = 'u8[4096]{0}', space=vmem, size = 0x1000, scoped, tag = 'output window, operand 0, single buffered']
    %8 = vsyncpa [#allocation4], 0
    %9 = vsyncpa [#allocation7], 0
    %s10 = scalar_lea.sflag [#allocation7], 1
    %11 = vsyncpa %s10, 0
    %12 = vsyncpa [#allocation5], 0
    loop: start=0, step=1, limit=5
    $region2: #{tpu_custom_call.1} parent=1 // loop_pre_header
      _
    $region3: #{tpu_custom_call.1} parent=1 // loop_header
      %s14 = sphi 0, %s18
      %p15 = scmp.ge.s32.totalorder %s14, 5
      %s21 = sphi 0, %s33
      %s22 = sphi 0, %s29
      %s23 = sphi 0, %s21
      %s24 = sphi 0, %s22
      %s25 = sphi 0, %s23
      %s26 = sphi 0, %s24
      %s36 = sphi 0, %s38
      %s39 = sphi 0, %s36
      %s40 = sphi 0, %s39
      %s56 = sphi 0, %s40
      %s62 = sphi 0, %s64
      %s65 = sphi 0, %s62
      %s66 = sphi 0, %s65
      %s82 = sphi 0, %s66
      %s88 = sphi 0, %s90
      %s91 = sphi 0, %s88
      %s92 = sphi 0, %s91
      %s108 = sphi 0, %s92
      %s114 = sphi 0, %s116
      %s117 = sphi 0, %s114
      %s118 = sphi 0, %s117
      %s134 = sphi 0, %s118
    $region4: #{tpu_custom_call.1} parent=1 // loop_header_branch
      %17 = sbr.rel (%p15) target = $region8
    $region5: #{tpu_custom_call.1} parent=1 // loop_body
      %s19 = ssub.s32 %s14, 1
      %s20 = ssub.s32 %s14, 2
      %s27 = sadd.s32 1, %s22
      %p28 = scmp.ge.s32.totalorder %s27, 3
      %s29 = scalar_select %p28, 0, %s27
      %s30 = sadd.s32 1, %s21
      %s31 = scalar_select %p28, %s30, %s21
      %p32 = scmp.ge.s32.totalorder %s31, 1
      %s33 = scalar_select %p32, 0, %s31
      %s34 = ssub.s32 %s21, %s33
      %p35 = scmp.eq.s32.totalorder %s34, 0
      %s37 = sadd.s32 %s36, 1
      %s38 = scalar_select %p35, %s36, %s37
      %p41 = pneg %p35
      %p42 = scmp.eq.s32.totalorder %s14, 2
      %p43 = por %p41, %p42
      %p44 = scmp.ne.s32.totalorder %s36, %s39
      %p45 = scmp.eq.s32.totalorder %s14, 0
      %p46 = por %p44, %p45
      %p47 = scmp.ne.s32.totalorder %s36, %s39
      %p48 = scmp.eq.s32.totalorder %s19, 2
      %p49 = por %p47, %p48
      %p50 = scmp.ne.s32.totalorder %s39, %s40
      %p51 = scmp.eq.s32.totalorder %s19, 0
      %p52 = por %p50, %p51
      %p53 = scmp.ne.s32.totalorder %s39, %s40
      %p54 = scmp.eq.s32.totalorder %s20, 2
      %p55 = por %p53, %p54
      %p57 = scmp.ne.s32.totalorder %s40, %s56
      %p58 = scmp.eq.s32.totalorder %s20, 0
      %p59 = por %p57, %p58
      %s60 = ssub.s32 %s22, %s29
      %p61 = scmp.eq.s32.totalorder %s60, 0
      %s63 = sadd.s32 %s62, 1
      %s64 = scalar_select %p61, %s62, %s63
      %p67 = pneg %p61
      %p68 = scmp.eq.s32.totalorder %s14, 2
      %p69 = por %p67, %p68
      %p70 = scmp.ne.s32.totalorder %s62, %s65
      %p71 = scmp.eq.s32.totalorder %s14, 0
      %p72 = por %p70, %p71
      %p73 = scmp.ne.s32.totalorder %s62, %s65
      %p74 = scmp.eq.s32.totalorder %s19, 2
      %p75 = por %p73, %p74
      %p76 = scmp.ne.s32.totalorder %s65, %s66
      %p77 = scmp.eq.s32.totalorder %s19, 0
      %p78 = por %p76, %p77
      %p79 = scmp.ne.s32.totalorder %s65, %s66
      %p80 = scmp.eq.s32.totalorder %s20, 2
      %p81 = por %p79, %p80
      %p83 = scmp.ne.s32.totalorder %s66, %s82
      %p84 = scmp.eq.s32.totalorder %s20, 0
      %p85 = por %p83, %p84
      %s86 = ssub.s32 %s22, %s29
      %p87 = scmp.eq.s32.totalorder %s86, 0
      %s89 = sadd.s32 %s88, 1
      %s90 = scalar_select %p87, %s88, %s89
      %p93 = pneg %p87
      %p94 = scmp.eq.s32.totalorder %s14, 2
      %p95 = por %p93, %p94
      %p96 = scmp.ne.s32.totalorder %s88, %s91
      %p97 = scmp.eq.s32.totalorder %s14, 0
      %p98 = por %p96, %p97
      %p99 = scmp.ne.s32.totalorder %s88, %s91
      %p100 = scmp.eq.s32.totalorder %s19, 2
      %p101 = por %p99, %p100
      %p102 = scmp.ne.s32.totalorder %s91, %s92
      %p103 = scmp.eq.s32.totalorder %s19, 0
      %p104 = por %p102, %p103
      %p105 = scmp.ne.s32.totalorder %s91, %s92
      %p106 = scmp.eq.s32.totalorder %s20, 2
      %p107 = por %p105, %p106
      %p109 = scmp.ne.s32.totalorder %s92, %s108
      %p110 = scmp.eq.s32.totalorder %s20, 0
      %p111 = por %p109, %p110
      %s112 = ssub.s32 %s21, %s33
      %p113 = scmp.eq.s32.totalorder %s112, 0
      %s115 = sadd.s32 %s114, 1
      %s116 = scalar_select %p113, %s114, %s115
      %p119 = pneg %p113
      %p120 = scmp.eq.s32.totalorder %s14, 2
      %p121 = por %p119, %p120
      %p122 = scmp.ne.s32.totalorder %s114, %s117
      %p123 = scmp.eq.s32.totalorder %s14, 0
      %p124 = por %p122, %p123
      %p125 = scmp.ne.s32.totalorder %s114, %s117
      %p126 = scmp.eq.s32.totalorder %s19, 2
      %p127 = por %p125, %p126
      %p128 = scmp.ne.s32.totalorder %s117, %s118
      %p129 = scmp.eq.s32.totalorder %s19, 0
      %p130 = por %p128, %p129
      %p131 = scmp.ne.s32.totalorder %s117, %s118
      %p132 = scmp.eq.s32.totalorder %s20, 2
      %p133 = por %p131, %p132
      %p135 = scmp.ne.s32.totalorder %s118, %s134
      %p136 = scmp.eq.s32.totalorder %s20, 0
      %p137 = por %p135, %p136
      %p138 = scmp.le.s32.totalorder 1, %s14
      %p139 = scmp.lt.s32.totalorder %s14, 4
      %p140 = pnand %p138, %p139
      %p141 = pneg %p140
      // Predicated region
      $region9: #{tpu_custom_call.1} parent=5 // pred_check
        _
      $region10: #{tpu_custom_call.1} parent=5 // pred_check_branch
        %143 = sbr.rel (%p140) target = $region12
      $region11: #{tpu_custom_call.1} parent=5 // pred_region
        %s144 = ssub.s32 %s14, 1
        // Predicated region
        $region13: #{tpu_custom_call.1} parent=11 // pred_check
          %p145 = pneg %p52
        $region14: #{tpu_custom_call.1} parent=11 // pred_check_branch
          %147 = sbr.rel (%p145) target = $region16
        $region15: #{tpu_custom_call.1} parent=11 // pred_region
          %149 = vsyncadd [#allocation4], 0
          %s150 = smul.addr %s23, 8
          %s151 = scalar_lea.hbm %s0, %s150
          %s153 = sshll.u32 %s151, 4
          %s154 = int_to_ptr.hbm [resolvable:$true] %s153
          %s155 = sshll.u32 [#allocation3], 4
          %s156 = int_to_ptr.vmem [resolvable:$true] %s155
          %158 = dma.hbm_to_vmem [thread:$0]  %s154, 128, %s156, [#allocation4]
        $region16: #{tpu_custom_call.1} parent=11 // pred_fallthru
          _
      $region12: #{tpu_custom_call.1} parent=5 // pred_fallthru
        _
      %p159 = scmp.lt.s32.totalorder %s14, 3
      // Predicated region
      $region17: #{tpu_custom_call.1} parent=5 // pred_check
        %p160 = pneg %p159
      $region18: #{tpu_custom_call.1} parent=5 // pred_check_branch
        %162 = sbr.rel (%p160) target = $region20
      $region19: #{tpu_custom_call.1} parent=5 // pred_region
        // Predicated region
        $region21: #{tpu_custom_call.1} parent=19 // pred_check
          %p163 = pneg %p72
        $region22: #{tpu_custom_call.1} parent=19 // pred_check_branch
          %165 = sbr.rel (%p163) target = $region24
        $region23: #{tpu_custom_call.1} parent=19 // pred_region
          %s166 = sand.u32 %s14, 1
          %s167 = scalar_lea.sflag [#allocation7], %s166
          %s168 = sand.u32 %s62, 1
          %s169 = smul.addr %s168, 128
          %s170 = scalar_lea.vmem [#allocation6], %s169
          %172 = vsyncadd %s167, 0
          %s173 = smul.addr %s22, 16
          %s174 = smul.addr %s173, 8
          %s175 = scalar_lea.hbm %s1, %s174
          %s176 = sshll.u32 %s175, 4
          %s177 = int_to_ptr.hbm [resolvable:$true] %s176
          %s178 = sshll.u32 %s170, 4
          %s179 = int_to_ptr.vmem [resolvable:$true] %s178
          %184 = dma.hbm_to_vmem [thread:$0]  %s177, 2048, %s179, %s167, 128, 128, 8
        $region24: #{tpu_custom_call.1} parent=19 // pred_fallthru
          _
        // Predicated region
        $region25: #{tpu_custom_call.1} parent=19 // pred_check
          %p185 = pneg %p98
        $region26: #{tpu_custom_call.1} parent=19 // pred_check_branch
          %187 = sbr.rel (%p185) target = $region28
        $region27: #{tpu_custom_call.1} parent=19 // pred_region
          %s188 = sand.u32 %s14, 1
          %s189 = scalar_lea.sflag [#allocation7], %s188
          %s190 = sand.u32 %s88, 1
          %s191 = scalar_lea.vmem [#allocation8], %s190
          %193 = vsyncadd %s189, 0
          %s194 = scalar_lea.hbm %s2, %s22
          %s196 = sshll.u32 %s194, 4
          %s197 = int_to_ptr.hbm [resolvable:$true] %s196
          %s198 = sshll.u32 %s191, 4
          %s199 = int_to_ptr.vmem [resolvable:$true] %s198
          %201 = dma.hbm_to_vmem [thread:$0]  %s197, 16, %s199, %s189
        $region28: #{tpu_custom_call.1} parent=19 // pred_fallthru
          _
      $region20: #{tpu_custom_call.1} parent=5 // pred_fallthru
        _
      %p202 = scmp.le.s32.totalorder 1, %s14
      %p203 = scmp.lt.s32.totalorder %s14, 4
      %p204 = pnand %p202, %p203
      %p205 = pneg %p204
      // Predicated region
      $region29: #{tpu_custom_call.1} parent=5 // pred_check
        _
      $region30: #{tpu_custom_call.1} parent=5 // pred_check_branch
        %207 = sbr.rel (%p204) target = $region32
      $region31: #{tpu_custom_call.1} parent=5 // pred_region
        %s208 = ssub.s32 %s14, 1
        // Predicated region
        $region33: #{tpu_custom_call.1} parent=31 // pred_check
          %p209 = pneg %p52
        $region34: #{tpu_custom_call.1} parent=31 // pred_check_branch
          %211 = sbr.rel (%p209) target = $region36
        $region35: #{tpu_custom_call.1} parent=31 // pred_region
          %213 = dma.done [#allocation4], 128
        $region36: #{tpu_custom_call.1} parent=31 // pred_fallthru
          _
        %s214 = sand.u32 %s19, 1
        %s215 = scalar_lea.sflag [#allocation7], %s214
        %s216 = sand.u32 %s65, 1
        %s217 = smul.addr %s216, 128
        %s218 = scalar_lea.vmem [#allocation6], %s217
        // Predicated region
        $region37: #{tpu_custom_call.1} parent=31 // pred_check
          %p219 = pneg %p78
        $region38: #{tpu_custom_call.1} parent=31 // pred_check_branch
          %221 = sbr.rel (%p219) target = $region40
        $region39: #{tpu_custom_call.1} parent=31 // pred_region
          %223 = dma.done %s215, 2048
        $region40: #{tpu_custom_call.1} parent=31 // pred_fallthru
          _
        %s224 = sand.u32 %s19, 1
        %s225 = scalar_lea.sflag [#allocation7], %s224
        %s226 = sand.u32 %s91, 1
        %s227 = scalar_lea.vmem [#allocation8], %s226
        // Predicated region
        $region41: #{tpu_custom_call.1} parent=31 // pred_check
          %p228 = pneg %p104
        $region42: #{tpu_custom_call.1} parent=31 // pred_check_branch
          %230 = sbr.rel (%p228) target = $region44
        $region43: #{tpu_custom_call.1} parent=31 // pred_region
          %232 = dma.done %s225, 16
        $region44: #{tpu_custom_call.1} parent=31 // pred_fallthru
          _
        %p233 = pneg %p52
        %p234 = pneg %p49
        %s235 = sand.u32 %s19, 1
        %s236 = scalar_lea.sflag [#allocation7], %s235
        %s237 = sand.u32 %s65, 1
        %s238 = smul.addr %s237, 128
        %s239 = scalar_lea.vmem [#allocation6], %s238
        %p240 = pneg %p78
        %p241 = pneg %p75
        %s242 = sand.u32 %s19, 1
        %s243 = scalar_lea.sflag [#allocation7], %s242
        %s244 = sand.u32 %s91, 1
        %s245 = scalar_lea.vmem [#allocation8], %s244
        %p246 = pneg %p104
        %p247 = pneg %p101
        %p248 = pneg %p130
        %p249 = pneg %p127
        %p250 = scmp.eq.s32.totalorder %s24, 0
        // Predicated region
        $region45: #{tpu_custom_call.1} parent=31 // pred_check
          %p251 = pneg %p250
        $region46: #{tpu_custom_call.1} parent=31 // pred_check_branch
          %253 = sbr.rel (%p251) target = $region48
        $region47: #{tpu_custom_call.1} parent=31 // pred_region
          %v254 = vld [vmem:[#allocation3] sm:$0xff]
          %v255 = vld [vmem:[%s218] sm:$0xff]
          %v256 = vld [vmem:[%s218 + $0x8] sm:$0xff]
          %v257 = vld [vmem:[%s218 + $0x10] sm:$0xff]
          %v258 = vld [vmem:[%s218 + $0x18] sm:$0xff]
          %v259 = vld [vmem:[%s218 + $0x20] sm:$0xff]
          %v260 = vld [vmem:[%s218 + $0x28] sm:$0xff]
          %v261 = vld [vmem:[%s218 + $0x30] sm:$0xff]
          %v262 = vld [vmem:[%s218 + $0x38] sm:$0xff]
          %v263 = vld [vmem:[%s218 + $0x40] sm:$0xff]
          %v264 = vld [vmem:[%s218 + $0x48] sm:$0xff]
          %v265 = vld [vmem:[%s218 + $0x50] sm:$0xff]
          %v266 = vld [vmem:[%s218 + $0x58] sm:$0xff]
          %v267 = vld [vmem:[%s218 + $0x60] sm:$0xff]
          %v268 = vld [vmem:[%s218 + $0x68] sm:$0xff]
          %v269 = vld [vmem:[%s218 + $0x70] sm:$0xff]
          %v270 = vld [vmem:[%s218 + $0x78] sm:$0xff]
          %v271 = vld [vmem:[%s227] sm:$0x1]
          %v273 = vperm.slane %v271, 0
          %275 = vmatpush.msra.mxu0 %v270
          %276 = vmatpush.msra.mxu0 %v269
          %277 = vmatpush.msra.mxu0 %v268
          %278 = vmatpush.msra.mxu0 %v267
          %279 = vmatpush.msra.mxu0 %v266
          %280 = vmatpush.msra.mxu0 %v265
          %281 = vmatpush.msra.mxu0 %v264
          %282 = vmatpush.msra.mxu0 %v263
          %283 = vmatpush.msra.mxu0 %v262
          %284 = vmatpush.msra.mxu0 %v261
          %285 = vmatpush.msra.mxu0 %v260
          %286 = vmatpush.msra.mxu0 %v259
          %287 = vmatpush.msra.mxu0 %v258
          %288 = vmatpush.msra.mxu0 %v257
          %289 = vmatpush.msra.mxu0 %v256
          %290 = vmatpush.msra.mxu0 %v255
          %291 = vmatmul.f32.gmra.mxu0 %v254
          %v292 = vpop.f32.mrf.mxu0
          %v293 = vadd.f32 %v273, %v292
          %294 = vdwg.mxu0
          %p295 = scmp.lt.s32.totalorder %s24, 2
          // Predicated region
          $region49: #{tpu_custom_call.1} parent=47 // pred_check
            %p296 = pneg %p295
          $region50: #{tpu_custom_call.1} parent=47 // pred_check_branch
            %298 = sbr.rel (%p296) target = $region52
          $region51: #{tpu_custom_call.1} parent=47 // pred_region
            %v299 = vmax.f32 %v293, 0.0
            %300 = vst [vmem:[#allocation2] sm:$0xff] %v299
          $region52: #{tpu_custom_call.1} parent=47 // pred_fallthru
            _
          %p301 = scmp.eq.s32.totalorder %s24, 2
          // Predicated region
          $region53: #{tpu_custom_call.1} parent=47 // pred_check
            %p302 = pneg %p301
          $region54: #{tpu_custom_call.1} parent=47 // pred_check_branch
            %304 = sbr.rel (%p302) target = $region56
          $region55: #{tpu_custom_call.1} parent=47 // pred_region
            %305 = vst [vmem:[#allocation9] sm:$0xff] %v293
          $region56: #{tpu_custom_call.1} parent=47 // pred_fallthru
            _
        $region48: #{tpu_custom_call.1} parent=31 // pred_fallthru
          _
        %p306 = scmp.ne.s32.totalorder %s24, 0
        // Predicated region
        $region57: #{tpu_custom_call.1} parent=31 // pred_check
          %p307 = pneg %p306
        $region58: #{tpu_custom_call.1} parent=31 // pred_check_branch
          %309 = sbr.rel (%p307) target = $region60
        $region59: #{tpu_custom_call.1} parent=31 // pred_region
          %v310 = vld [vmem:[#allocation2] sm:$0xff]
          %v311 = vld [vmem:[%s218] sm:$0xff]
          %v312 = vld [vmem:[%s218 + $0x8] sm:$0xff]
          %v313 = vld [vmem:[%s218 + $0x10] sm:$0xff]
          %v314 = vld [vmem:[%s218 + $0x18] sm:$0xff]
          %v315 = vld [vmem:[%s218 + $0x20] sm:$0xff]
          %v316 = vld [vmem:[%s218 + $0x28] sm:$0xff]
          %v317 = vld [vmem:[%s218 + $0x30] sm:$0xff]
          %v318 = vld [vmem:[%s218 + $0x38] sm:$0xff]
          %v319 = vld [vmem:[%s218 + $0x40] sm:$0xff]
          %v320 = vld [vmem:[%s218 + $0x48] sm:$0xff]
          %v321 = vld [vmem:[%s218 + $0x50] sm:$0xff]
          %v322 = vld [vmem:[%s218 + $0x58] sm:$0xff]
          %v323 = vld [vmem:[%s218 + $0x60] sm:$0xff]
          %v324 = vld [vmem:[%s218 + $0x68] sm:$0xff]
          %v325 = vld [vmem:[%s218 + $0x70] sm:$0xff]
          %v326 = vld [vmem:[%s218 + $0x78] sm:$0xff]
          %v327 = vld [vmem:[%s227] sm:$0x1]
          %v329 = vperm.slane %v327, 0
          %331 = vmatpush.msra.mxu0 %v326
          %332 = vmatpush.msra.mxu0 %v325
          %333 = vmatpush.msra.mxu0 %v324
          %334 = vmatpush.msra.mxu0 %v323
          %335 = vmatpush.msra.mxu0 %v322
          %336 = vmatpush.msra.mxu0 %v321
          %337 = vmatpush.msra.mxu0 %v320
          %338 = vmatpush.msra.mxu0 %v319
          %339 = vmatpush.msra.mxu0 %v318
          %340 = vmatpush.msra.mxu0 %v317
          %341 = vmatpush.msra.mxu0 %v316
          %342 = vmatpush.msra.mxu0 %v315
          %343 = vmatpush.msra.mxu0 %v314
          %344 = vmatpush.msra.mxu0 %v313
          %345 = vmatpush.msra.mxu0 %v312
          %346 = vmatpush.msra.mxu0 %v311
          %347 = vmatmul.f32.gmra.mxu0 %v310
          %v348 = vpop.f32.mrf.mxu0
          %v349 = vadd.f32 %v329, %v348
          %350 = vdwg.mxu0
          %p351 = scmp.lt.s32.totalorder %s24, 2
          // Predicated region
          $region61: #{tpu_custom_call.1} parent=59 // pred_check
            %p352 = pneg %p351
          $region62: #{tpu_custom_call.1} parent=59 // pred_check_branch
            %354 = sbr.rel (%p352) target = $region64
          $region63: #{tpu_custom_call.1} parent=59 // pred_region
            %v355 = vmax.f32 %v349, 0.0
            %356 = vst [vmem:[#allocation2] sm:$0xff] %v355
          $region64: #{tpu_custom_call.1} parent=59 // pred_fallthru
            _
          %p357 = scmp.eq.s32.totalorder %s24, 2
          // Predicated region
          $region65: #{tpu_custom_call.1} parent=59 // pred_check
            %p358 = pneg %p357
          $region66: #{tpu_custom_call.1} parent=59 // pred_check_branch
            %360 = sbr.rel (%p358) target = $region68
          $region67: #{tpu_custom_call.1} parent=59 // pred_region
            %361 = vst [vmem:[#allocation9] sm:$0xff] %v349
          $region68: #{tpu_custom_call.1} parent=59 // pred_fallthru
            _
        $region60: #{tpu_custom_call.1} parent=31 // pred_fallthru
          _
        // Predicated region
        $region69: #{tpu_custom_call.1} parent=31 // pred_check
          %p362 = pneg %p127
        $region70: #{tpu_custom_call.1} parent=31 // pred_check_branch
          %364 = sbr.rel (%p362) target = $region72
        $region71: #{tpu_custom_call.1} parent=31 // pred_region
          %366 = vsyncadd [#allocation5], 0
          %s367 = smul.addr %s23, 8
          %s368 = scalar_lea.hbm %s3, %s367
          %s370 = sshll.u32 [#allocation9], 4
          %s371 = int_to_ptr.vmem [resolvable:$true] %s370
          %s372 = sshll.u32 %s368, 4
          %s373 = int_to_ptr.hbm [resolvable:$true] %s372
          %375 = dma.vmem_to_hbm [thread:$0]  %s371, 128, %s373, [#allocation5]
        $region72: #{tpu_custom_call.1} parent=31 // pred_fallthru
          _
        // Predicated region
        $region73: #{tpu_custom_call.1} parent=31 // pred_check
          %p376 = pneg %p127
        $region74: #{tpu_custom_call.1} parent=31 // pred_check_branch
          %378 = sbr.rel (%p376) target = $region76
        $region75: #{tpu_custom_call.1} parent=31 // pred_region
          %380 = dma.done [#allocation5], 128
        $region76: #{tpu_custom_call.1} parent=31 // pred_fallthru
          _
      $region32: #{tpu_custom_call.1} parent=5 // pred_fallthru
        _
      %p381 = scmp.le.s32.totalorder 2, %s14
      // Predicated region
      $region77: #{tpu_custom_call.1} parent=5 // pred_check
        %p382 = pneg %p381
      $region78: #{tpu_custom_call.1} parent=5 // pred_check_branch
        %384 = sbr.rel (%p382) target = $region80
      $region79: #{tpu_custom_call.1} parent=5 // pred_region
        %s385 = ssub.s32 %s14, 2
      $region80: #{tpu_custom_call.1} parent=5 // pred_fallthru
        _
    $region6: #{tpu_custom_call.1} parent=1 // loop_footer
      %s18 = sadd.s32 1, %s14
    $region7: #{tpu_custom_call.1} parent=1 // loop_footer_branch
      %13 = sbr.rel target = $region3
    $region8: #{tpu_custom_call.1} parent=1 // loop_exit
      _
    %386 = vsyncpa [#allocation4], 1
    %s387 = scalar_lea.sflag [#allocation4], 1
    %388 = vsyncpa %s387, 1
    %389 = vsyncpa [#allocation7], 1
    %s390 = scalar_lea.sflag [#allocation7], 1
    %391 = vsyncpa %s390, 1
    %392 = vsyncpa [#allocation5], 1
    %s393 = scalar_lea.sflag [#allocation5], 1
    %394 = vsyncpa %s393, 1

</llo_original>
